<compile_context>
chip_gen: v7x
topology: tpu7x:2x2x1
jax: 0.10.0
libtpu: 0.0.40
codegen_flags: <defaults>
</compile_context>

<pallas_src>
import jax
import jax.numpy as jnp
from jax.experimental import pallas as pl
from jax.experimental.pallas import tpu as pltpu


# ----------------------------------------------------------------------------
# Pallas kernel: fused (spectral-normalized linear -> leaky_relu -> fused heads)
# ----------------------------------------------------------------------------
def _affine_heads_kernel(inv_sigma_ref, w_ref, wm_ref, bm_ref, wh_ref, bh_ref,
                         out_ref):
    # hidden = leaky_relu((w @ Wm_t) * (1/sigma) + b_main, 0.2)
    # matmul operands are bf16 (MXU native), accumulation + elementwise in fp32.
    h = jnp.dot(w_ref[...], wm_ref[...], preferred_element_type=jnp.float32)
    h = h * inv_sigma_ref[0, 0] + bm_ref[...]
    h = jnp.where(h >= 0.0, h, 0.2 * h)

    # fused heads: [Bblk, 2C] = h @ [H, 2C]  (scale | bias concatenated on lanes)
    o = jnp.dot(h.astype(wh_ref.dtype), wh_ref[...],
                preferred_element_type=jnp.float32)
    out_ref[...] = (o + bh_ref[...]).astype(out_ref.dtype)


def affine_heads(inv_sigma, w, w_main_t, b_main, w_heads_t, b_heads):
    """inv_sigma: [1,1] f32 (SMEM); w: [B, Z] bf16; weights [in, out] bf16;
    biases [1, out] f32. Returns fused [B, 2C] f32 output."""
    B, Z = w.shape
    H = w_main_t.shape[1]
    C2 = w_heads_t.shape[1]

    # Batch tile: whole batch if small, else 512-row blocks (multiple of 8
    # sublanes); keeps resident weights + double-buffered w/out tiles well
    # under the 32 MiB scoped / 64 MiB v7x VMEM limits.
    block_b = B if B <= 512 else 512
    grid = (pl.cdiv(B, block_b),)

    flops = 2 * B * Z * H + 2 * B * H * C2
    bytes_accessed = (
        B * Z * 2 + Z * H * 2 + H * C2 * 2          # bf16 activations + weights
        + H * 4 + C2 * 4 + 4                        # fp32 biases + scalar
        + B * C2 * 4                                # fp32 output
    )

    out = pl.pallas_call(
        _affine_heads_kernel,
        out_shape=jax.ShapeDtypeStruct((B, C2), jnp.float32),
        grid=grid,
        in_specs=[
            pl.BlockSpec(memory_space=pltpu.MemorySpace.SMEM),   # 1/sigma scalar
            pl.BlockSpec((block_b, Z), lambda i: (i, 0)),        # w: tiles over B
            pl.BlockSpec((Z, H), lambda i: (0, 0)),              # main W: resident
            pl.BlockSpec((1, H), lambda i: (0, 0)),              # main b: resident
            pl.BlockSpec((H, C2), lambda i: (0, 0)),             # fused head W
            pl.BlockSpec((1, C2), lambda i: (0, 0)),             # fused head b
        ],
        out_specs=pl.BlockSpec((block_b, C2), lambda i: (i, 0)),
        compiler_params=pltpu.CompilerParams(
            dimension_semantics=("parallel",),
            vmem_limit_bytes=32 * 1024 * 1024,
        ),
        cost_estimate=pl.CostEstimate(
            flops=flops, transcendentals=0, bytes_accessed=bytes_accessed),
    )(inv_sigma, w, w_main_t, b_main, w_heads_t, b_heads)
    return out


# ----------------------------------------------------------------------------
# Parameter setup / spectral norm (glue, plain JAX, fully jitted per call)
# ----------------------------------------------------------------------------
def _linear_init(key, fan_in, fan_out):
    # PyTorch nn.Linear default init: U(-1/sqrt(fan_in), 1/sqrt(fan_in))
    kw, kb = jax.random.split(key)
    bound = 1.0 / jnp.sqrt(jnp.float32(fan_in))
    W = jax.random.uniform(kw, (fan_out, fan_in), jnp.float32, -bound, bound)
    b = jax.random.uniform(kb, (fan_out,), jnp.float32, -bound, bound)
    return W, b


def _l2_normalize(x, eps=1e-12):
    return x / jnp.maximum(jnp.linalg.norm(x), eps)


@jax.jit
def a_forward(w, params, u):
    """Full forward: power iteration (on pre-transposed weight, no transpose),
    then the fused Pallas kernel. Returns (scale, bias, u_new)."""
    wm_t_f32 = params["w_main_t_f32"]                # [Z, H] = W_main^T
    # One power-iteration step (PyTorch spectral_norm training-forward default):
    # v = normalize(W^T u); u' = normalize(W v); sigma = u'^T W v
    v = _l2_normalize(wm_t_f32 @ u)                  # [Z]
    wv = v @ wm_t_f32                                # [H]  (= W v)
    u_new = _l2_normalize(wv)
    sigma = jnp.dot(u_new, wv)
    inv_sigma = (1.0 / sigma).reshape(1, 1).astype(jnp.float32)

    out = affine_heads(
        inv_sigma,
        w.astype(jnp.bfloat16),
        params["w_main_t_bf16"], params["b_main"],
        params["w_heads_t_bf16"], params["b_heads"],
    )
    C = out.shape[1] // 2
    return out[:, :C], out[:, C:], u_new


class AParamsPallas:
    """Mirrors the PyTorch module `A` forward, hot path in a single Pallas call."""

    def __init__(self, z_dims, out_channels, key):
        k_main, k_scale, k_bias, k_u = jax.random.split(key, 4)
        hid = out_channels * 2
        W_main, b_main = _linear_init(k_main, z_dims, hid)
        W_scale, b_scale = _linear_init(k_scale, hid, out_channels)
        W_bias, b_bias = _linear_init(k_bias, hid, out_channels)

        w_main_t = W_main.T                                         # [Z, H], once
        w_heads_t = jnp.concatenate([W_scale.T, W_bias.T], axis=1)  # [H, 2C]
        b_heads = jnp.concatenate([b_scale, b_bias]).reshape(1, -1) # [1, 2C]

        self.params = dict(
            w_main_t_f32=w_main_t,                        # for power iteration
            w_main_t_bf16=w_main_t.astype(jnp.bfloat16),  # MXU operand
            b_main=b_main.reshape(1, -1),
            w_heads_t_bf16=w_heads_t.astype(jnp.bfloat16),
            b_heads=b_heads,
        )
        # spectral_norm power-iteration buffer u (dim = out features of main)
        self.u = _l2_normalize(jax.random.normal(k_u, (hid,), jnp.float32))

    def __call__(self, w):
        scale, bias, u_new = a_forward(w, self.params, self.u)
        self.u = u_new   # keep the power-iteration state update
        return scale, bias


# ----------------------------------------------------------------------------
if __name__ == "__main__":
    Z_DIMS = 32
    OUT_CHANNELS = 16
    BATCH = 8

    key = jax.random.PRNGKey(0)
    k_param, k_in = jax.random.split(key)

    model = AParamsPallas(Z_DIMS, OUT_CHANNELS, k_param)
    w = jax.random.normal(k_in, (BATCH, Z_DIMS), jnp.float32)

    scale, bias = model(w)
    jax.block_until_ready((scale, bias))

    assert scale.shape == (BATCH, OUT_CHANNELS)
    assert bias.shape == (BATCH, OUT_CHANNELS)
    assert bool(jnp.all(jnp.isfinite(scale))) and bool(jnp.all(jnp.isfinite(bias)))
    print("KERNEL_OK")
</pallas_src>

<mosaic_0001>
module attributes {stable_mosaic.version = 11 : i64} {
  func.func @_affine_heads_kernel(%arg0: i32, %arg1: memref<1x1xf32, #tpu.memory_space<smem>>, %arg2: memref<8x32xbf16, #tpu.memory_space<vmem>>, %arg3: memref<32x32xbf16, #tpu.memory_space<vmem>>, %arg4: memref<1x32xf32, #tpu.memory_space<vmem>>, %arg5: memref<32x32xbf16, #tpu.memory_space<vmem>>, %arg6: memref<1x32xf32, #tpu.memory_space<vmem>>, %arg7: memref<8x32xf32, #tpu.memory_space<vmem>>) attributes {dimension_semantics = [#tpu.dimension_semantics<parallel>], iteration_bounds = array<i64: 1>, scalar_prefetch = 0 : i64, scratch_operands = 0 : i64, tpu.core_type = #tpu.core_type<tc>, window_params = [{transform_indices = @transform_0, window_bounds = array<i64: 1, 1>}, {transform_indices = @transform_1, window_bounds = array<i64: 8, 32>}, {pipeline_mode = #tpu.pipeline_mode<synchronous>, transform_indices = @transform_2, window_bounds = array<i64: 32, 32>}, {pipeline_mode = #tpu.pipeline_mode<synchronous>, transform_indices = @transform_3, window_bounds = array<i64: 1, 32>}, {pipeline_mode = #tpu.pipeline_mode<synchronous>, transform_indices = @transform_4, window_bounds = array<i64: 32, 32>}, {pipeline_mode = #tpu.pipeline_mode<synchronous>, transform_indices = @transform_5, window_bounds = array<i64: 1, 32>}, {transform_indices = @transform_6, window_bounds = array<i64: 8, 32>}]} {
    %c0 = arith.constant 0 : index
    %c0_0 = arith.constant 0 : index
    %0 = vector.load %arg2[%c0, %c0_0] : memref<8x32xbf16, #tpu.memory_space<vmem>>, vector<8x32xbf16>
    %c0_1 = arith.constant 0 : index
    %c0_2 = arith.constant 0 : index
    %1 = vector.load %arg3[%c0_1, %c0_2] : memref<32x32xbf16, #tpu.memory_space<vmem>>, vector<32x32xbf16>
    %cst = arith.constant dense<0.000000e+00> : vector<8x32xf32>
    %2 = tpu.matmul %0, %1, %cst {dimension_numbers = #tpu.dot_dimension_numbers<[1], [0], [0], [1], [0, 0, 1, 1], [], []>} : vector<8x32xbf16>, vector<32x32xbf16>, vector<8x32xf32> -> vector<8x32xf32>
    %c0_3 = arith.constant 0 : index
    %c0_4 = arith.constant 0 : index
    %3 = memref.load %arg1[%c0_3, %c0_4] : memref<1x1xf32, #tpu.memory_space<smem>>
    %4 = vector.broadcast %3 : f32 to vector<8x32xf32>
    %5 = arith.mulf %2, %4 : vector<8x32xf32>
    %c0_5 = arith.constant 0 : index
    %c0_6 = arith.constant 0 : index
    %6 = vector.load %arg4[%c0_5, %c0_6] : memref<1x32xf32, #tpu.memory_space<vmem>>, vector<1x32xf32>
    %7 = vector.broadcast %6 : vector<1x32xf32> to vector<8x32xf32>
    %8 = arith.addf %5, %7 : vector<8x32xf32>
    %cst_7 = arith.constant 0.000000e+00 : f32
    %9 = vector.broadcast %cst_7 : f32 to vector<8x32xf32>
    %10 = arith.cmpf oge, %8, %9 : vector<8x32xf32>
    %cst_8 = arith.constant 2.000000e-01 : f32
    %11 = vector.broadcast %cst_8 : f32 to vector<8x32xf32>
    %12 = arith.mulf %11, %8 : vector<8x32xf32>
    %13 = arith.select %10, %8, %12 : vector<8x32xi1>, vector<8x32xf32>
    %14 = arith.truncf %13 : vector<8x32xf32> to vector<8x32xbf16>
    %c0_9 = arith.constant 0 : index
    %c0_10 = arith.constant 0 : index
    %15 = vector.load %arg5[%c0_9, %c0_10] : memref<32x32xbf16, #tpu.memory_space<vmem>>, vector<32x32xbf16>
    %cst_11 = arith.constant dense<0.000000e+00> : vector<8x32xf32>
    %16 = tpu.matmul %14, %15, %cst_11 {dimension_numbers = #tpu.dot_dimension_numbers<[1], [0], [0], [1], [0, 0, 1, 1], [], []>} : vector<8x32xbf16>, vector<32x32xbf16>, vector<8x32xf32> -> vector<8x32xf32>
    %c0_12 = arith.constant 0 : index
    %c0_13 = arith.constant 0 : index
    %17 = vector.load %arg6[%c0_12, %c0_13] : memref<1x32xf32, #tpu.memory_space<vmem>>, vector<1x32xf32>
    %18 = vector.broadcast %17 : vector<1x32xf32> to vector<8x32xf32>
    %19 = arith.addf %16, %18 : vector<8x32xf32>
    %c0_14 = arith.constant 0 : index
    %c0_15 = arith.constant 0 : index
    %20 = vector.load %arg7[%c0_14, %c0_15] : memref<8x32xf32, #tpu.memory_space<vmem>>, vector<8x32xf32>
    tpu.vector_store %arg7[%c0_14, %c0_15], %19 {strides = array<i32>} : memref<8x32xf32, #tpu.memory_space<vmem>>, vector<8x32xf32>,
    return
  }
  func.func @transform_0(%arg0: i32) -> (i32, i32) {
    %c0_i32 = arith.constant 0 : i32
    %c0_i32_0 = arith.constant 0 : i32
    %c0_i32_1 = arith.constant 0 : i32
    return %c0_i32, %c0_i32_0 : i32, i32
  }
  func.func @transform_1(%arg0: i32) -> (i32, i32) {
    %c0_i32 = arith.constant 0 : i32
    %c0_i32_0 = arith.constant 0 : i32
    return %arg0, %c0_i32 : i32, i32
  }
  func.func @transform_2(%arg0: i32) -> (i32, i32) {
    %c0_i32 = arith.constant 0 : i32
    %c0_i32_0 = arith.constant 0 : i32
    %c0_i32_1 = arith.constant 0 : i32
    return %c0_i32, %c0_i32_0 : i32, i32
  }
  func.func @transform_3(%arg0: i32) -> (i32, i32) {
    %c0_i32 = arith.constant 0 : i32
    %c0_i32_0 = arith.constant 0 : i32
    %c0_i32_1 = arith.constant 0 : i32
    return %c0_i32, %c0_i32_0 : i32, i32
  }
  func.func @transform_4(%arg0: i32) -> (i32, i32) {
    %c0_i32 = arith.constant 0 : i32
    %c0_i32_0 = arith.constant 0 : i32
    %c0_i32_1 = arith.constant 0 : i32
    return %c0_i32, %c0_i32_0 : i32, i32
  }
  func.func @transform_5(%arg0: i32) -> (i32, i32) {
    %c0_i32 = arith.constant 0 : i32
    %c0_i32_0 = arith.constant 0 : i32
    %c0_i32_1 = arith.constant 0 : i32
    return %c0_i32, %c0_i32_0 : i32, i32
  }
  func.func @transform_6(%arg0: i32) -> (i32, i32) {
    %c0_i32 = arith.constant 0 : i32
    %c0_i32_0 = arith.constant 0 : i32
    return %arg0, %c0_i32 : i32, i32
  }
}

</mosaic_0001>

<llo_original>
// kernel: a_forward.1
$region0: #{a_forward.1}
  #allocation0 [shape = 'u32[]', space=smem, size = 0x4, offset = 0x4, fixed_abs, tag = 'smem constant byte address 0x4 - core index']
  #allocation1 [shape = 'u32[144,128]{1,0:T(1,128)}', space=vmem, size = 0x12000, scoped, tag = 'internal scratch']
  #allocation2 [shape = 'f32[1,1]{1,0:T(1,128)S(6)}', space=smem, size = 0x200, scoped, tag = 'scoped memory for a_forward.1']
  %s0 = inlined_call_operand.<no memory space> [shape: f32[1,1], index: 0, kind: input, shape index: {}]
  %s1 = inlined_call_operand.vmem [shape: bf16[8,32], index: 1, kind: input, shape index: {}]
  %s2 = inlined_call_operand.vmem [shape: bf16[32,32], index: 2, kind: input, shape index: {}]
  %s3 = inlined_call_operand.vmem [shape: f32[1,32], index: 3, kind: input, shape index: {}]
  %s4 = inlined_call_operand.vmem [shape: bf16[32,32], index: 4, kind: input, shape index: {}]
  %s5 = inlined_call_operand.vmem [shape: f32[1,32], index: 5, kind: input, shape index: {}]
  %s6 = inlined_call_operand.vmem [shape: f32[8,32], index: 6, kind: output, shape index: {}]
  %s7 = sld [smem:[#allocation0]]
  $region34: #{a_forward.1} parent=0
    _
  %s9 = ssub.s32 1, %s7
  %s10 = scalar_select 0, %s9, %s7
  %11 = sst [smem:[#allocation2]] %s0
  // Predicated region
  $region2: #{a_forward.1} parent=0 // pred_check
    _
  $region3: #{a_forward.1} parent=0 // pred_check_branch
    %13 = sbr.rel (0) target = $region5
  $region4: #{a_forward.1} parent=0 // pred_region
    _
  $region5: #{a_forward.1} parent=0 // pred_fallthru
    _
  // Predicated region
  $region6: #{a_forward.1} parent=0 // pred_check
    _
  $region7: #{a_forward.1} parent=0 // pred_check_branch
    %15 = sbr.rel (0) target = $region9
  $region8: #{a_forward.1} parent=0 // pred_region
    _
  $region9: #{a_forward.1} parent=0 // pred_fallthru
    _
  // Predicated region
  $region10: #{a_forward.1} parent=0 // pred_check
    _
  $region11: #{a_forward.1} parent=0 // pred_check_branch
    %17 = sbr.rel (0) target = $region13
  $region12: #{a_forward.1} parent=0 // pred_region
    _
  $region13: #{a_forward.1} parent=0 // pred_fallthru
    _
  // Predicated region
  $region14: #{a_forward.1} parent=0 // pred_check
    _
  $region15: #{a_forward.1} parent=0 // pred_check_branch
    %19 = sbr.rel (0) target = $region17
  $region16: #{a_forward.1} parent=0 // pred_region
    _
  $region17: #{a_forward.1} parent=0 // pred_fallthru
    _
  // Predicated region
  $region18: #{a_forward.1} parent=0 // pred_check
    _
  $region19: #{a_forward.1} parent=0 // pred_check_branch
    %21 = sbr.rel (0) target = $region21
  $region20: #{a_forward.1} parent=0 // pred_region
    _
  $region21: #{a_forward.1} parent=0 // pred_fallthru
    _
  // Predicated region
  $region22: #{a_forward.1} parent=0 // pred_check
    _
  $region23: #{a_forward.1} parent=0 // pred_check_branch
    %23 = sbr.rel (0) target = $region25
  $region24: #{a_forward.1} parent=0 // pred_region
    _
  $region25: #{a_forward.1} parent=0 // pred_fallthru
    _
  %v25 = vld [vmem:[%s1] sm:$0xf]
  %v26 = vld [vmem:[%s2] sm:$0xf]
  %v27 = vld [vmem:[%s2 + $0x4] sm:$0xf]
  %v28 = vld [vmem:[%s2 + $0x8] sm:$0xf]
  %v29 = vld [vmem:[%s2 + $0xc] sm:$0xf]
  %v34 = vunpack.c.l.b16 %v26
  %v35 = vunpack.c.l.b16 %v27
  %v36 = vunpack.c.l.b16 %v28
  %v37 = vunpack.c.l.b16 %v29
  %v38 = vpack.c.b16 %v35, %v34
  %v39 = vpack.c.b16 %v37, %v36
  %vm42 = vcmask 261120
  %v44 = vsel %vm42, %v25, 0
  %46 = vmatprep.subr.bf16.mxu0 0
  %47 = vmatpush1.bf16.msra.mxu0 %v38
  %48 = vmatprep.subr.bf16.mxu0 0
  %49 = vmatpush1.bf16.msra.mxu0 %v39
  %50 = vmatprep.subr.bf16.mxu0 0
  %51 = vmatpush1.bf16.msra.mxu0 0
  %52 = vmatprep.subr.bf16.mxu0 0
  %53 = vmatpush1.bf16.msra.mxu0 0
  %54 = vmatprep.subr.bf16.mxu0 0
  %55 = vmatpush1.bf16.msra.mxu0 0
  %56 = vmatprep.subr.bf16.mxu0 0
  %57 = vmatpush1.bf16.msra.mxu0 0
  %58 = vmatprep.subr.bf16.mxu0 0
  %59 = vmatpush1.bf16.msra.mxu0 0
  %60 = vmatprep.subr.bf16.mxu0 0
  %61 = vmatpush1.bf16.msra.mxu0 0
  %62 = vmatprep.subr.bf16.mxu0 0
  %63 = vmatpush1.bf16.msra.mxu0 0
  %64 = vmatprep.subr.bf16.mxu0 0
  %65 = vmatpush1.bf16.msra.mxu0 0
  %66 = vmatprep.subr.bf16.mxu0 0
  %67 = vmatpush1.bf16.msra.mxu0 0
  %68 = vmatprep.subr.bf16.mxu0 0
  %69 = vmatpush1.bf16.msra.mxu0 0
  %70 = vmatprep.subr.bf16.mxu0 0
  %71 = vmatpush1.bf16.msra.mxu0 0
  %72 = vmatprep.subr.bf16.mxu0 0
  %73 = vmatpush1.bf16.msra.mxu0 0
  %74 = vmatprep.subr.bf16.mxu0 0
  %75 = vmatpush1.bf16.msra.mxu0 0
  %76 = vmatprep.subr.bf16.mxu0 0
  %77 = vmatpush1.bf16.msra.mxu0 0
  %78 = vmatprep.mubr.bf16.mxu0 0
  %79 = vmatmul.mubr.bf16.gmra.mrb[0].mxu0 %v44
  %v80 = vpop.f32.mrb[0].mxu0
  %v81 = vadd.f32 0.0, %v80
  %v82 = vpop.f32.mrb[0].mxu0
  %v83 = vpop.f32.mrb[0].mxu0
  %v84 = vpop.f32.mrb[0].mxu0
  %85 = vdwg.mxu0
  %s86 = sld [smem:[#allocation2]]
  %v87 = vstv %s86
  %v88 = vmul.f32 %v81, %v87
  %v89 = vld [vmem:[%s3] sm:$0x1]
  %v91 = vlaneseq
  %v92 = vshrl.u32 %v91, 7
  %v93 = vsub.s32 0, %v92
  %v94 = vrot.slane %v89, %v93
  %v96 = vadd.f32 %v88, %v94
  %vm97 = vcmp.ge.f32.partialorder %v96, 0.0
  %v98 = vmul.f32 %v96, 0.2
  %v99 = vsel %vm97, %v96, %v98
  %v100 = vpack.c.bf16 %v99, %v99
  %v101 = vld [vmem:[%s4] sm:$0xf]
  %v102 = vld [vmem:[%s4 + $0x4] sm:$0xf]
  %v103 = vld [vmem:[%s4 + $0x8] sm:$0xf]
  %v104 = vld [vmem:[%s4 + $0xc] sm:$0xf]
  %v105 = vld [vmem:[%s5] sm:$0x1]
  %v107 = vlaneseq
  %v108 = vshrl.u32 %v107, 7
  %v109 = vsub.s32 0, %v108
  %v110 = vrot.slane %v105, %v109
  %v116 = vunpack.c.l.b16 %v101
  %v117 = vunpack.c.l.b16 %v102
  %v118 = vunpack.c.l.b16 %v103
  %v119 = vunpack.c.l.b16 %v104
  %v120 = vpack.c.b16 %v117, %v116
  %v121 = vpack.c.b16 %v119, %v118
  %v125 = vsel %vm42, %v100, 0
  %127 = vmatprep.subr.bf16.mxu0 0
  %128 = vmatpush1.bf16.msra.mxu0 %v120
  %129 = vmatprep.subr.bf16.mxu0 0
  %130 = vmatpush1.bf16.msra.mxu0 %v121
  %131 = vmatprep.subr.bf16.mxu0 0
  %132 = vmatpush1.bf16.msra.mxu0 0
  %133 = vmatprep.subr.bf16.mxu0 0
  %134 = vmatpush1.bf16.msra.mxu0 0
  %135 = vmatprep.subr.bf16.mxu0 0
  %136 = vmatpush1.bf16.msra.mxu0 0
  %137 = vmatprep.subr.bf16.mxu0 0
  %138 = vmatpush1.bf16.msra.mxu0 0
  %139 = vmatprep.subr.bf16.mxu0 0
  %140 = vmatpush1.bf16.msra.mxu0 0
  %141 = vmatprep.subr.bf16.mxu0 0
  %142 = vmatpush1.bf16.msra.mxu0 0
  %143 = vmatprep.subr.bf16.mxu0 0
  %144 = vmatpush1.bf16.msra.mxu0 0
  %145 = vmatprep.subr.bf16.mxu0 0
  %146 = vmatpush1.bf16.msra.mxu0 0
  %147 = vmatprep.subr.bf16.mxu0 0
  %148 = vmatpush1.bf16.msra.mxu0 0
  %149 = vmatprep.subr.bf16.mxu0 0
  %150 = vmatpush1.bf16.msra.mxu0 0
  %151 = vmatprep.subr.bf16.mxu0 0
  %152 = vmatpush1.bf16.msra.mxu0 0
  %153 = vmatprep.subr.bf16.mxu0 0
  %154 = vmatpush1.bf16.msra.mxu0 0
  %155 = vmatprep.subr.bf16.mxu0 0
  %156 = vmatpush1.bf16.msra.mxu0 0
  %157 = vmatprep.subr.bf16.mxu0 0
  %158 = vmatpush1.bf16.msra.mxu0 0
  %159 = vmatprep.mubr.bf16.mxu0 0
  %160 = vmatmul.mubr.bf16.gmra.mrb[0].mxu0 %v125
  %v161 = vpop.f32.mrb[0].mxu0
  %v162 = vadd.f32 %v110, %v161
  %v163 = vpop.f32.mrb[0].mxu0
  %v164 = vpop.f32.mrb[0].mxu0
  %v165 = vpop.f32.mrb[0].mxu0
  %166 = vdwg.mxu0
  %167 = vst.msk [vmem:[%s6] sm:$0xff] %vm42, %v162
  // Predicated region
  $region26: #{a_forward.1} parent=0 // pred_check
    _
  $region27: #{a_forward.1} parent=0 // pred_check_branch
    %169 = sbr.rel (0) target = $region29
  $region28: #{a_forward.1} parent=0 // pred_region
    _
  $region29: #{a_forward.1} parent=0 // pred_fallthru
    _
  // Predicated region
  $region30: #{a_forward.1} parent=0 // pred_check
    _
  $region31: #{a_forward.1} parent=0 // pred_check_branch
    %171 = sbr.rel (0) target = $region33
  $region32: #{a_forward.1} parent=0 // pred_region
    _
  $region33: #{a_forward.1} parent=0 // pred_fallthru
    _

</llo_original>
